<compile_context>
chip_gen: v5e
topology: v5e:2x2
jax: 0.10.0
libtpu: 0.0.40
codegen_flags: <defaults>
</compile_context>

<pallas_src>
import functools

import jax
import jax.numpy as jnp
from jax.experimental import pallas as pl
from jax.experimental.pallas import tpu as pltpu


def _conv_stats_kernel(x_ref, w_ref, mask_ref, z_ref, mean_ref, m2_ref, patch_scr,
                       *, H, W, Cin, Q, Bblk):
    """Phase 1: lane-dense im2col conv + per-block (Welford) BN partial stats.

    x_ref     : (Bblk, Cin, L)     bf16  pre-padded, row-major-flattened images
    w_ref     : (Cout, 9*Cin)      bf16  weights, column order (kh*3+kw)*Cin + cin
    mask_ref  : (1, Bblk*Q)        f32   1.0 on real pixels, 0.0 on pad columns
    z_ref     : (Bblk, Cout, Q)    f32   conv activation, stashed for phase 2
    mean_ref  : (1, Cout, 1)       f32   per-block channel mean of the conv
    m2_ref    : (1, Cout, 1)       f32   per-block centered sum of squares
    patch_scr : (9*Cin, Bblk*Q)    bf16  im2col buffer (pixels on lanes)
    """
    Wp = W + 2
    # im2col: each tap is a single contiguous lane slice of the flattened padded
    # image (offset kh*(W+2)+kw), copied as full-lane rows into the bf16 patch.
    for b in range(Bblk):
        for kh in range(3):
            for kw in range(3):
                t = kh * 3 + kw
                off = kh * Wp + kw
                patch_scr[t * Cin:(t + 1) * Cin, b * Q:(b + 1) * Q] = \
                    x_ref[b, :, off:off + Q]

    # Single MXU matmul with K = 9*Cin, pixels on lanes; f32 accumulation.
    z = jnp.dot(w_ref[...], patch_scr[...],
                preferred_element_type=jnp.float32)              # (Cout, Bblk*Q)

    # Stash the f32 activation (lane-dense store) for phase 2.
    for b in range(Bblk):
        z_ref[b] = z[:, b * Q:(b + 1) * Q]

    # Per-block BN partial statistics (centered -> robust cross-block combine).
    mask = mask_ref[...]                                         # (1, Bblk*Q)
    inv_cnt = 1.0 / float(Bblk * H * W)
    zm = z * mask
    m = jnp.sum(zm, axis=1, keepdims=True) * inv_cnt             # (Cout, 1)
    d = (z - m) * mask
    m2 = jnp.sum(d * d, axis=1, keepdims=True)                   # (Cout, 1)
    mean_ref[0] = m
    m2_ref[0] = m2


def _bn_relu_pool_kernel(z_ref, scale_ref, shift_ref, out_ref, *, Bblk):
    """Phase 2: BN scale/shift -> ReLU -> AvgPool(2,2) as three full-lane adds.

    z_ref     : (Bblk, Cout, 4, P) f32  conv activation, 2x2-pool-member-major
    scale_ref : (Cout, 1)          f32  gamma / sqrt(var + eps)
    shift_ref : (Cout, 1)          f32  beta - mean * scale   (bias cancels in BN)
    out_ref   : (Bblk, Cout, P)    f32  pooled output (NCHW-flat)
    """
    s = scale_ref[...]
    t = shift_ref[...]
    for b in range(Bblk):
        acc = None
        for i in range(4):                                       # 2x2 window members
            y = jnp.maximum(z_ref[b, :, i, :] * s + t, 0.0)      # (Cout, P)
            acc = y if acc is None else acc + y
        out_ref[b] = acc * 0.25


def resblock_forward(x_nchw, conv_w, conv_b, bn_gamma, bn_beta, *,
                     eps=1e-5, batch_block=1):
    """Forward pass of `resblock`. x: (N, Cin, H, W) -> (N, Cout, H//2, W//2)."""
    N, Cin, H, W = x_nchw.shape
    Cout = conv_w.shape[0]
    assert H % 2 == 0 and W % 2 == 0
    assert N % batch_block == 0
    Bblk = batch_block
    G = N // Bblk
    Wp = W + 2
    Q = H * Wp                    # conv-output lanes per image (2 junk cols per row)
    P = (H // 2) * (W // 2)       # pooled pixels per image
    L = (H + 2) * Wp + Wp         # flattened padded length (+tail so every tap slice is in-bounds)

    # ---- layout prep (tiny, fused by XLA) --------------------------------------
    x_pad = jnp.pad(x_nchw.astype(jnp.bfloat16), ((0, 0), (0, 0), (1, 1), (1, 1)))
    x_flat = x_pad.reshape(N, Cin, (H + 2) * Wp)
    x_flat = jnp.pad(x_flat, ((0, 0), (0, 0), (0, Wp)))              # (N, Cin, L)

    # OIHW -> (Cout, kh, kw, cin) -> (Cout, 9*Cin), matching the patch row order.
    w_mat = jnp.transpose(conv_w, (0, 2, 3, 1)).reshape(Cout, 9 * Cin).astype(jnp.bfloat16)

    # Valid-pixel mask over the per-image lanes (pad columns w in {W, W+1}).
    lane_w = jnp.arange(Q, dtype=jnp.int32) % Wp
    mask = jnp.tile((lane_w < W).astype(jnp.float32), (Bblk,)).reshape(1, Bblk * Q)

    cparams = pltpu.CompilerParams(dimension_semantics=("parallel",))

    # ---- phase 1: conv + per-block BN partial stats -----------------------------
    kern1 = functools.partial(_conv_stats_kernel, H=H, W=W, Cin=Cin, Q=Q, Bblk=Bblk)
    z_act, m_blk, m2_blk = pl.pallas_call(
        kern1,
        out_shape=(jax.ShapeDtypeStruct((N, Cout, Q), jnp.float32),
                   jax.ShapeDtypeStruct((G, Cout, 1), jnp.float32),
                   jax.ShapeDtypeStruct((G, Cout, 1), jnp.float32)),
        grid_spec=pltpu.PrefetchScalarGridSpec(
            num_scalar_prefetch=0,
            grid=(G,),
            in_specs=[
                pl.BlockSpec((Bblk, Cin, L), lambda i: (i, 0, 0)),
                pl.BlockSpec((Cout, 9 * Cin), lambda i: (0, 0)),
                pl.BlockSpec((1, Bblk * Q), lambda i: (0, 0)),
            ],
            out_specs=(
                pl.BlockSpec((Bblk, Cout, Q), lambda i: (i, 0, 0)),
                pl.BlockSpec((1, Cout, 1), lambda i: (i, 0, 0)),
                pl.BlockSpec((1, Cout, 1), lambda i: (i, 0, 0)),
            ),
            # NOTE(v7x): patch = 9*Cin*Bblk*Q*2B; re-derive Bblk / row blocking and
            # set vmem_limit_bytes for 64 MiB-VMEM parts at large H/W/Cin.
            scratch_shapes=[pltpu.VMEM((9 * Cin, Bblk * Q), jnp.bfloat16)]),
        compiler_params=cparams,
    )(x_flat, w_mat, mask)

    # ---- cross-block BN stat combine + scale/shift (tiny per-channel math) ------
    cnt_blk = Bblk * H * W
    m_blk = m_blk[:, :, 0]                                           # (G, Cout)
    m2_blk = m2_blk[:, :, 0]
    mean = jnp.mean(m_blk, axis=0)                                   # (Cout,)
    var = (jnp.sum(m2_blk, axis=0)
           + cnt_blk * jnp.sum((m_blk - mean[None, :]) ** 2, axis=0)) / (G * cnt_blk)
    inv_std = jax.lax.rsqrt(jnp.maximum(var, 0.0) + eps)
    g = bn_gamma.astype(jnp.float32) * inv_std                       # (Cout,)
    scale = g.reshape(Cout, 1)
    shift = (bn_beta.astype(jnp.float32) - mean * g).reshape(Cout, 1)
    # Conv bias is a pure per-channel mean shift and cancels exactly under the
    # training-mode BatchNorm that follows, so `conv_b` never enters the compute.

    # ---- small XLA relayout: activation -> 2x2-pool-member-major ----------------
    z4 = z_act.reshape(N, Cout, H, Wp)[:, :, :, :W]                  # drop pad cols
    z4 = z4.reshape(N, Cout, H // 2, 2, W // 2, 2)
    z_mem = jnp.transpose(z4, (0, 1, 3, 5, 2, 4)).reshape(N, Cout, 4, P)

    # ---- phase 2: BN scale/shift -> ReLU -> AvgPool(2,2) ------------------------
    kern2 = functools.partial(_bn_relu_pool_kernel, Bblk=Bblk)
    out_flat = pl.pallas_call(
        kern2,
        out_shape=jax.ShapeDtypeStruct((N, Cout, P), jnp.float32),
        grid_spec=pltpu.PrefetchScalarGridSpec(
            num_scalar_prefetch=0,
            grid=(G,),
            in_specs=[
                pl.BlockSpec((Bblk, Cout, 4, P), lambda i: (i, 0, 0, 0)),
                pl.BlockSpec((Cout, 1), lambda i: (0, 0)),
                pl.BlockSpec((Cout, 1), lambda i: (0, 0)),
            ],
            out_specs=pl.BlockSpec((Bblk, Cout, P), lambda i: (i, 0, 0))),
        compiler_params=cparams,
    )(z_mem, scale, shift)

    # Output is already NCHW-flat; only a free reshape is needed.
    return out_flat.reshape(N, Cout, H // 2, W // 2)


def _reference(x_nchw, conv_w, conv_b, bn_gamma, bn_beta, eps=1e-5):
    """Pure-JAX reference (NCHW), for correctness checking only."""
    y = jax.lax.conv_general_dilated(
        x_nchw.astype(jnp.float32), conv_w.astype(jnp.float32),
        window_strides=(1, 1), padding=((1, 1), (1, 1)),
        dimension_numbers=("NCHW", "OIHW", "NCHW"))
    y = y + conv_b.reshape(1, -1, 1, 1)
    mean = jnp.mean(y, axis=(0, 2, 3), keepdims=True)
    var = jnp.mean((y - mean) ** 2, axis=(0, 2, 3), keepdims=True)
    y = (y - mean) / jnp.sqrt(var + eps)
    y = y * bn_gamma.reshape(1, -1, 1, 1) + bn_beta.reshape(1, -1, 1, 1)
    y = jnp.maximum(y, 0.0)
    N, C, H, W = y.shape
    return y.reshape(N, C, H // 2, 2, W // 2, 2).mean(axis=(3, 5))


if __name__ == "__main__":
    # Small deterministic config: batch=2, in_feat=4, out_feat=8, spatial=16x16.
    N, Cin, Cout, H, W = 2, 4, 8, 16, 16
    key = jax.random.PRNGKey(0)
    k_x, k_w, k_b, k_g, k_bt = jax.random.split(key, 5)

    # The kernel feeds the MXU bf16 operands; pre-round the test data to bf16 so
    # the f32 reference sees the same values (bf16 x bf16 products are exact in f32).
    def as_bf16_f32(a):
        return a.astype(jnp.bfloat16).astype(jnp.float32)

    x = as_bf16_f32(jax.random.normal(k_x, (N, Cin, H, W), dtype=jnp.float32))
    conv_w = as_bf16_f32(jax.random.normal(k_w, (Cout, Cin, 3, 3), dtype=jnp.float32) * 0.1)
    conv_b = jax.random.normal(k_b, (Cout,), dtype=jnp.float32) * 0.1
    bn_gamma = 1.0 + 0.1 * jax.random.normal(k_g, (Cout,), dtype=jnp.float32)
    bn_beta = 0.1 * jax.random.normal(k_bt, (Cout,), dtype=jnp.float32)

    ref = _reference(x, conv_w, conv_b, bn_gamma, bn_beta)

    # batch_block=1: two "parallel" grid steps (keeps both v7x TensorCores busy);
    # batch_block=2: whole batch in one grid step (per-step overhead amortization).
    for bblk in (1, 2):
        fwd = jax.jit(functools.partial(resblock_forward, batch_block=bblk))
        out = jax.block_until_ready(fwd(x, conv_w, conv_b, bn_gamma, bn_beta))
        assert out.shape == (N, Cout, H // 2, W // 2), out.shape
        err = float(jnp.max(jnp.abs(out - ref)))
        assert err < 1e-3, (bblk, err)

    print("KERNEL_OK")
</pallas_src>

<mosaic_0001>
module attributes {stable_mosaic.version = 11 : i64} {
  func.func @_conv_stats_kernel(%arg0: i32, %arg1: memref<1x4x342xbf16, #tpu.memory_space<vmem>>, %arg2: memref<8x36xbf16, #tpu.memory_space<vmem>>, %arg3: memref<1x288xf32, #tpu.memory_space<vmem>>, %arg4: memref<1x8x288xf32, #tpu.memory_space<vmem>>, %arg5: memref<1x8x1xf32, #tpu.memory_space<vmem>>, %arg6: memref<1x8x1xf32, #tpu.memory_space<vmem>>, %arg7: memref<36x288xbf16, #tpu.memory_space<vmem>>) attributes {dimension_semantics = [#tpu.dimension_semantics<parallel>], iteration_bounds = array<i64: 2>, scalar_prefetch = 0 : i64, scratch_operands = 1 : i64, tpu.core_type = #tpu.core_type<tc>, window_params = [{transform_indices = @transform_0, window_bounds = array<i64: 1, 4, 342>}, {pipeline_mode = #tpu.pipeline_mode<synchronous>, transform_indices = @transform_1, window_bounds = array<i64: 8, 36>}, {pipeline_mode = #tpu.pipeline_mode<synchronous>, transform_indices = @transform_2, window_bounds = array<i64: 1, 288>}, {transform_indices = @transform_3, window_bounds = array<i64: 1, 8, 288>}, {transform_indices = @transform_4, window_bounds = array<i64: 1, 8, 1>}, {transform_indices = @transform_5, window_bounds = array<i64: 1, 8, 1>}]} {
    %c0 = arith.constant 0 : index
    %c0_0 = arith.constant 0 : index
    %c0_1 = arith.constant 0 : index
    %0 = vector.load %arg1[%c0, %c0_0, %c0_1] : memref<1x4x342xbf16, #tpu.memory_space<vmem>>, vector<1x4x288xbf16>
    %1 = vector.shape_cast %0 : vector<1x4x288xbf16> to vector<4x288xbf16>
    %c0_2 = arith.constant 0 : index
    %c0_3 = arith.constant 0 : index
    %2 = vector.load %arg7[%c0_2, %c0_3] : memref<36x288xbf16, #tpu.memory_space<vmem>>, vector<4x288xbf16>
    tpu.vector_store %arg7[%c0_2, %c0_3], %1 {strides = array<i32>} : memref<36x288xbf16, #tpu.memory_space<vmem>>, vector<4x288xbf16>,
    %c0_4 = arith.constant 0 : index
    %c0_5 = arith.constant 0 : index
    %c1 = arith.constant 1 : index
    %3 = vector.load %arg1[%c0_4, %c0_5, %c1] : memref<1x4x342xbf16, #tpu.memory_space<vmem>>, vector<1x4x288xbf16>
    %4 = vector.shape_cast %3 : vector<1x4x288xbf16> to vector<4x288xbf16>
    %c4 = arith.constant 4 : index
    %c0_6 = arith.constant 0 : index
    %5 = vector.load %arg7[%c4, %c0_6] : memref<36x288xbf16, #tpu.memory_space<vmem>>, vector<4x288xbf16>
    tpu.vector_store %arg7[%c4, %c0_6], %4 {strides = array<i32>} : memref<36x288xbf16, #tpu.memory_space<vmem>>, vector<4x288xbf16>,
    %c0_7 = arith.constant 0 : index
    %c0_8 = arith.constant 0 : index
    %c2 = arith.constant 2 : index
    %6 = vector.load %arg1[%c0_7, %c0_8, %c2] : memref<1x4x342xbf16, #tpu.memory_space<vmem>>, vector<1x4x288xbf16>
    %7 = vector.shape_cast %6 : vector<1x4x288xbf16> to vector<4x288xbf16>
    %c8 = arith.constant 8 : index
    %c0_9 = arith.constant 0 : index
    %8 = vector.load %arg7[%c8, %c0_9] : memref<36x288xbf16, #tpu.memory_space<vmem>>, vector<4x288xbf16>
    tpu.vector_store %arg7[%c8, %c0_9], %7 {strides = array<i32>} : memref<36x288xbf16, #tpu.memory_space<vmem>>, vector<4x288xbf16>,
    %c0_10 = arith.constant 0 : index
    %c0_11 = arith.constant 0 : index
    %c18 = arith.constant 18 : index
    %9 = vector.load %arg1[%c0_10, %c0_11, %c18] : memref<1x4x342xbf16, #tpu.memory_space<vmem>>, vector<1x4x288xbf16>
    %10 = vector.shape_cast %9 : vector<1x4x288xbf16> to vector<4x288xbf16>
    %c12 = arith.constant 12 : index
    %c0_12 = arith.constant 0 : index
    %11 = vector.load %arg7[%c12, %c0_12] : memref<36x288xbf16, #tpu.memory_space<vmem>>, vector<4x288xbf16>
    tpu.vector_store %arg7[%c12, %c0_12], %10 {strides = array<i32>} : memref<36x288xbf16, #tpu.memory_space<vmem>>, vector<4x288xbf16>,
    %c0_13 = arith.constant 0 : index
    %c0_14 = arith.constant 0 : index
    %c19 = arith.constant 19 : index
    %12 = vector.load %arg1[%c0_13, %c0_14, %c19] : memref<1x4x342xbf16, #tpu.memory_space<vmem>>, vector<1x4x288xbf16>
    %13 = vector.shape_cast %12 : vector<1x4x288xbf16> to vector<4x288xbf16>
    %c16 = arith.constant 16 : index
    %c0_15 = arith.constant 0 : index
    %14 = vector.load %arg7[%c16, %c0_15] : memref<36x288xbf16, #tpu.memory_space<vmem>>, vector<4x288xbf16>
    tpu.vector_store %arg7[%c16, %c0_15], %13 {strides = array<i32>} : memref<36x288xbf16, #tpu.memory_space<vmem>>, vector<4x288xbf16>,
    %c0_16 = arith.constant 0 : index
    %c0_17 = arith.constant 0 : index
    %c20 = arith.constant 20 : index
    %15 = vector.load %arg1[%c0_16, %c0_17, %c20] : memref<1x4x342xbf16, #tpu.memory_space<vmem>>, vector<1x4x288xbf16>
    %16 = vector.shape_cast %15 : vector<1x4x288xbf16> to vector<4x288xbf16>
    %c20_18 = arith.constant 20 : index
    %c0_19 = arith.constant 0 : index
    %17 = vector.load %arg7[%c20_18, %c0_19] : memref<36x288xbf16, #tpu.memory_space<vmem>>, vector<4x288xbf16>
    tpu.vector_store %arg7[%c20_18, %c0_19], %16 {strides = array<i32>} : memref<36x288xbf16, #tpu.memory_space<vmem>>, vector<4x288xbf16>,
    %c0_20 = arith.constant 0 : index
    %c0_21 = arith.constant 0 : index
    %c36 = arith.constant 36 : index
    %18 = vector.load %arg1[%c0_20, %c0_21, %c36] : memref<1x4x342xbf16, #tpu.memory_space<vmem>>, vector<1x4x288xbf16>
    %19 = vector.shape_cast %18 : vector<1x4x288xbf16> to vector<4x288xbf16>
    %c24 = arith.constant 24 : index
    %c0_22 = arith.constant 0 : index
    %20 = vector.load %arg7[%c24, %c0_22] : memref<36x288xbf16, #tpu.memory_space<vmem>>, vector<4x288xbf16>
    tpu.vector_store %arg7[%c24, %c0_22], %19 {strides = array<i32>} : memref<36x288xbf16, #tpu.memory_space<vmem>>, vector<4x288xbf16>,
    %c0_23 = arith.constant 0 : index
    %c0_24 = arith.constant 0 : index
    %c37 = arith.constant 37 : index
    %21 = vector.load %arg1[%c0_23, %c0_24, %c37] : memref<1x4x342xbf16, #tpu.memory_space<vmem>>, vector<1x4x288xbf16>
    %22 = vector.shape_cast %21 : vector<1x4x288xbf16> to vector<4x288xbf16>
    %c28 = arith.constant 28 : index
    %c0_25 = arith.constant 0 : index
    %23 = vector.load %arg7[%c28, %c0_25] : memref<36x288xbf16, #tpu.memory_space<vmem>>, vector<4x288xbf16>
    tpu.vector_store %arg7[%c28, %c0_25], %22 {strides = array<i32>} : memref<36x288xbf16, #tpu.memory_space<vmem>>, vector<4x288xbf16>,
    %c0_26 = arith.constant 0 : index
    %c0_27 = arith.constant 0 : index
    %c38 = arith.constant 38 : index
    %24 = vector.load %arg1[%c0_26, %c0_27, %c38] : memref<1x4x342xbf16, #tpu.memory_space<vmem>>, vector<1x4x288xbf16>
    %25 = vector.shape_cast %24 : vector<1x4x288xbf16> to vector<4x288xbf16>
    %c32 = arith.constant 32 : index
    %c0_28 = arith.constant 0 : index
    %26 = vector.load %arg7[%c32, %c0_28] : memref<36x288xbf16, #tpu.memory_space<vmem>>, vector<4x288xbf16>
    tpu.vector_store %arg7[%c32, %c0_28], %25 {strides = array<i32>} : memref<36x288xbf16, #tpu.memory_space<vmem>>, vector<4x288xbf16>,
    %c0_29 = arith.constant 0 : index
    %c0_30 = arith.constant 0 : index
    %27 = vector.load %arg2[%c0_29, %c0_30] : memref<8x36xbf16, #tpu.memory_space<vmem>>, vector<8x36xbf16>
    %c0_31 = arith.constant 0 : index
    %c0_32 = arith.constant 0 : index
    %28 = vector.load %arg7[%c0_31, %c0_32] : memref<36x288xbf16, #tpu.memory_space<vmem>>, vector<36x288xbf16>
    %cst = arith.constant dense<0.000000e+00> : vector<8x288xf32>
    %29 = tpu.matmul %27, %28, %cst {dimension_numbers = #tpu.dot_dimension_numbers<[1], [0], [0], [1], [0, 0, 1, 1], [], []>} : vector<8x36xbf16>, vector<36x288xbf16>, vector<8x288xf32> -> vector<8x288xf32>
    %c0_33 = arith.constant 0 : index
    %c0_34 = arith.constant 0 : index
    %c0_35 = arith.constant 0 : index
    %30 = vector.load %arg4[%c0_33, %c0_34, %c0_35] : memref<1x8x288xf32, #tpu.memory_space<vmem>>, vector<1x8x288xf32>
    %31 = vector.shape_cast %30 : vector<1x8x288xf32> to vector<8x288xf32>
    %32 = vector.shape_cast %29 : vector<8x288xf32> to vector<1x8x288xf32>
    tpu.vector_store %arg4[%c0_33, %c0_34, %c0_35], %32 {strides = array<i32>} : memref<1x8x288xf32, #tpu.memory_space<vmem>>, vector<1x8x288xf32>,
    %c0_36 = arith.constant 0 : index
    %c0_37 = arith.constant 0 : index
    %33 = vector.load %arg3[%c0_36, %c0_37] : memref<1x288xf32, #tpu.memory_space<vmem>>, vector<1x288xf32>
    %34 = vector.broadcast %33 : vector<1x288xf32> to vector<8x288xf32>
    %35 = arith.mulf %29, %34 : vector<8x288xf32>
    %cst_38 = arith.constant dense<0.000000e+00> : vector<8xf32>
    %36 = vector.multi_reduction <add>, %35, %cst_38 [1] : vector<8x288xf32> to vector<8xf32>
    %37 = vector.shape_cast %36 : vector<8xf32> to vector<8x1xf32>
    %cst_39 = arith.constant 3.906250e-03 : f32
    %38 = vector.broadcast %cst_39 : f32 to vector<8x1xf32>
    %39 = arith.mulf %37, %38 : vector<8x1xf32>
    %40 = vector.broadcast %39 : vector<8x1xf32> to vector<8x288xf32>
    %41 = arith.subf %29, %40 : vector<8x288xf32>
    %42 = vector.broadcast %33 : vector<1x288xf32> to vector<8x288xf32>
    %43 = arith.mulf %41, %42 : vector<8x288xf32>
    %44 = arith.mulf %43, %43 : vector<8x288xf32>
    %cst_40 = arith.constant dense<0.000000e+00> : vector<8xf32>
    %45 = vector.multi_reduction <add>, %44, %cst_40 [1] : vector<8x288xf32> to vector<8xf32>
    %46 = vector.shape_cast %45 : vector<8xf32> to vector<8x1xf32>
    %c0_41 = arith.constant 0 : index
    %c0_42 = arith.constant 0 : index
    %c0_43 = arith.constant 0 : index
    %47 = vector.load %arg5[%c0_41, %c0_42, %c0_43] : memref<1x8x1xf32, #tpu.memory_space<vmem>>, vector<1x8x1xf32>
    %48 = vector.shape_cast %47 : vector<1x8x1xf32> to vector<8x1xf32>
    %49 = vector.shape_cast %39 : vector<8x1xf32> to vector<1x8x1xf32>
    tpu.vector_store %arg5[%c0_41, %c0_42, %c0_43], %49 {strides = array<i32>} : memref<1x8x1xf32, #tpu.memory_space<vmem>>, vector<1x8x1xf32>,
    %c0_44 = arith.constant 0 : index
    %c0_45 = arith.constant 0 : index
    %c0_46 = arith.constant 0 : index
    %50 = vector.load %arg6[%c0_44, %c0_45, %c0_46] : memref<1x8x1xf32, #tpu.memory_space<vmem>>, vector<1x8x1xf32>
    %51 = vector.shape_cast %50 : vector<1x8x1xf32> to vector<8x1xf32>
    %52 = vector.shape_cast %46 : vector<8x1xf32> to vector<1x8x1xf32>
    tpu.vector_store %arg6[%c0_44, %c0_45, %c0_46], %52 {strides = array<i32>} : memref<1x8x1xf32, #tpu.memory_space<vmem>>, vector<1x8x1xf32>,
    return
  }
  func.func @transform_0(%arg0: i32) -> (i32, i32, i32) {
    %c0_i32 = arith.constant 0 : i32
    %c0_i32_0 = arith.constant 0 : i32
    %c0_i32_1 = arith.constant 0 : i32
    return %arg0, %c0_i32, %c0_i32_0 : i32, i32, i32
  }
  func.func @transform_1(%arg0: i32) -> (i32, i32) {
    %c0_i32 = arith.constant 0 : i32
    %c0_i32_0 = arith.constant 0 : i32
    %c0_i32_1 = arith.constant 0 : i32
    return %c0_i32, %c0_i32_0 : i32, i32
  }
  func.func @transform_2(%arg0: i32) -> (i32, i32) {
    %c0_i32 = arith.constant 0 : i32
    %c0_i32_0 = arith.constant 0 : i32
    %c0_i32_1 = arith.constant 0 : i32
    return %c0_i32, %c0_i32_0 : i32, i32
  }
  func.func @transform_3(%arg0: i32) -> (i32, i32, i32) {
    %c0_i32 = arith.constant 0 : i32
    %c0_i32_0 = arith.constant 0 : i32
    %c0_i32_1 = arith.constant 0 : i32
    return %arg0, %c0_i32, %c0_i32_0 : i32, i32, i32
  }
  func.func @transform_4(%arg0: i32) -> (i32, i32, i32) {
    %c0_i32 = arith.constant 0 : i32
    %c0_i32_0 = arith.constant 0 : i32
    %c0_i32_1 = arith.constant 0 : i32
    return %arg0, %c0_i32, %c0_i32_0 : i32, i32, i32
  }
  func.func @transform_5(%arg0: i32) -> (i32, i32, i32) {
    %c0_i32 = arith.constant 0 : i32
    %c0_i32_0 = arith.constant 0 : i32
    %c0_i32_1 = arith.constant 0 : i32
    return %arg0, %c0_i32, %c0_i32_0 : i32, i32, i32
  }
}

module attributes {stable_mosaic.version = 11 : i64} {
  func.func @_bn_relu_pool_kernel(%arg0: i32, %arg1: memref<1x8x4x64xf32, #tpu.memory_space<vmem>>, %arg2: memref<8x1xf32, #tpu.memory_space<vmem>>, %arg3: memref<8x1xf32, #tpu.memory_space<vmem>>, %arg4: memref<1x8x64xf32, #tpu.memory_space<vmem>>) attributes {dimension_semantics = [#tpu.dimension_semantics<parallel>], iteration_bounds = array<i64: 2>, scalar_prefetch = 0 : i64, scratch_operands = 0 : i64, tpu.core_type = #tpu.core_type<tc>, window_params = [{transform_indices = @transform_0, window_bounds = array<i64: 1, 8, 4, 64>}, {pipeline_mode = #tpu.pipeline_mode<synchronous>, transform_indices = @transform_1, window_bounds = array<i64: 8, 1>}, {pipeline_mode = #tpu.pipeline_mode<synchronous>, transform_indices = @transform_2, window_bounds = array<i64: 8, 1>}, {transform_indices = @transform_3, window_bounds = array<i64: 1, 8, 64>}]} {
    %c0 = arith.constant 0 : index
    %c0_0 = arith.constant 0 : index
    %0 = vector.load %arg2[%c0, %c0_0] : memref<8x1xf32, #tpu.memory_space<vmem>>, vector<8x1xf32>
    %c0_1 = arith.constant 0 : index
    %c0_2 = arith.constant 0 : index
    %1 = vector.load %arg3[%c0_1, %c0_2] : memref<8x1xf32, #tpu.memory_space<vmem>>, vector<8x1xf32>
    %c0_3 = arith.constant 0 : index
    %c0_4 = arith.constant 0 : index
    %c0_5 = arith.constant 0 : index
    %c0_6 = arith.constant 0 : index
    %2 = vector.load %arg1[%c0_3, %c0_4, %c0_5, %c0_6] : memref<1x8x4x64xf32, #tpu.memory_space<vmem>>, vector<1x8x1x64xf32>
    %3 = vector.shape_cast %2 : vector<1x8x1x64xf32> to vector<8x64xf32>
    %4 = vector.broadcast %0 : vector<8x1xf32> to vector<8x64xf32>
    %5 = arith.mulf %3, %4 : vector<8x64xf32>
    %6 = vector.broadcast %1 : vector<8x1xf32> to vector<8x64xf32>
    %7 = arith.addf %5, %6 : vector<8x64xf32>
    %cst = arith.constant 0.000000e+00 : f32
    %8 = vector.broadcast %cst : f32 to vector<8x64xf32>
    %9 = arith.maximumf %7, %8 : vector<8x64xf32>
    %c0_7 = arith.constant 0 : index
    %c0_8 = arith.constant 0 : index
    %c1 = arith.constant 1 : index
    %c0_9 = arith.constant 0 : index
    %10 = vector.load %arg1[%c0_7, %c0_8, %c1, %c0_9] : memref<1x8x4x64xf32, #tpu.memory_space<vmem>>, vector<1x8x1x64xf32>
    %11 = vector.shape_cast %10 : vector<1x8x1x64xf32> to vector<8x64xf32>
    %12 = vector.broadcast %0 : vector<8x1xf32> to vector<8x64xf32>
    %13 = arith.mulf %11, %12 : vector<8x64xf32>
    %14 = vector.broadcast %1 : vector<8x1xf32> to vector<8x64xf32>
    %15 = arith.addf %13, %14 : vector<8x64xf32>
    %cst_10 = arith.constant 0.000000e+00 : f32
    %16 = vector.broadcast %cst_10 : f32 to vector<8x64xf32>
    %17 = arith.maximumf %15, %16 : vector<8x64xf32>
    %18 = arith.addf %9, %17 : vector<8x64xf32>
    %c0_11 = arith.constant 0 : index
    %c0_12 = arith.constant 0 : index
    %c2 = arith.constant 2 : index
    %c0_13 = arith.constant 0 : index
    %19 = vector.load %arg1[%c0_11, %c0_12, %c2, %c0_13] : memref<1x8x4x64xf32, #tpu.memory_space<vmem>>, vector<1x8x1x64xf32>
    %20 = vector.shape_cast %19 : vector<1x8x1x64xf32> to vector<8x64xf32>
    %21 = vector.broadcast %0 : vector<8x1xf32> to vector<8x64xf32>
    %22 = arith.mulf %20, %21 : vector<8x64xf32>
    %23 = vector.broadcast %1 : vector<8x1xf32> to vector<8x64xf32>
    %24 = arith.addf %22, %23 : vector<8x64xf32>
    %cst_14 = arith.constant 0.000000e+00 : f32
    %25 = vector.broadcast %cst_14 : f32 to vector<8x64xf32>
    %26 = arith.maximumf %24, %25 : vector<8x64xf32>
    %27 = arith.addf %18, %26 : vector<8x64xf32>
    %c0_15 = arith.constant 0 : index
    %c0_16 = arith.constant 0 : index
    %c3 = arith.constant 3 : index
    %c0_17 = arith.constant 0 : index
    %28 = vector.load %arg1[%c0_15, %c0_16, %c3, %c0_17] : memref<1x8x4x64xf32, #tpu.memory_space<vmem>>, vector<1x8x1x64xf32>
    %29 = vector.shape_cast %28 : vector<1x8x1x64xf32> to vector<8x64xf32>
    %30 = vector.broadcast %0 : vector<8x1xf32> to vector<8x64xf32>
    %31 = arith.mulf %29, %30 : vector<8x64xf32>
    %32 = vector.broadcast %1 : vector<8x1xf32> to vector<8x64xf32>
    %33 = arith.addf %31, %32 : vector<8x64xf32>
    %cst_18 = arith.constant 0.000000e+00 : f32
    %34 = vector.broadcast %cst_18 : f32 to vector<8x64xf32>
    %35 = arith.maximumf %33, %34 : vector<8x64xf32>
    %36 = arith.addf %27, %35 : vector<8x64xf32>
    %cst_19 = arith.constant 2.500000e-01 : f32
    %37 = vector.broadcast %cst_19 : f32 to vector<8x64xf32>
    %38 = arith.mulf %36, %37 : vector<8x64xf32>
    %c0_20 = arith.constant 0 : index
    %c0_21 = arith.constant 0 : index
    %c0_22 = arith.constant 0 : index
    %39 = vector.load %arg4[%c0_20, %c0_21, %c0_22] : memref<1x8x64xf32, #tpu.memory_space<vmem>>, vector<1x8x64xf32>
    %40 = vector.shape_cast %39 : vector<1x8x64xf32> to vector<8x64xf32>
    %41 = vector.shape_cast %38 : vector<8x64xf32> to vector<1x8x64xf32>
    tpu.vector_store %arg4[%c0_20, %c0_21, %c0_22], %41 {strides = array<i32>} : memref<1x8x64xf32, #tpu.memory_space<vmem>>, vector<1x8x64xf32>,
    return
  }
  func.func @transform_0(%arg0: i32) -> (i32, i32, i32, i32) {
    %c0_i32 = arith.constant 0 : i32
    %c0_i32_0 = arith.constant 0 : i32
    %c0_i32_1 = arith.constant 0 : i32
    %c0_i32_2 = arith.constant 0 : i32
    return %arg0, %c0_i32, %c0_i32_0, %c0_i32_1 : i32, i32, i32, i32
  }
  func.func @transform_1(%arg0: i32) -> (i32, i32) {
    %c0_i32 = arith.constant 0 : i32
    %c0_i32_0 = arith.constant 0 : i32
    %c0_i32_1 = arith.constant 0 : i32
    return %c0_i32, %c0_i32_0 : i32, i32
  }
  func.func @transform_2(%arg0: i32) -> (i32, i32) {
    %c0_i32 = arith.constant 0 : i32
    %c0_i32_0 = arith.constant 0 : i32
    %c0_i32_1 = arith.constant 0 : i32
    return %c0_i32, %c0_i32_0 : i32, i32
  }
  func.func @transform_3(%arg0: i32) -> (i32, i32, i32) {
    %c0_i32 = arith.constant 0 : i32
    %c0_i32_0 = arith.constant 0 : i32
    %c0_i32_1 = arith.constant 0 : i32
    return %arg0, %c0_i32, %c0_i32_0 : i32, i32, i32
  }
}

</mosaic_0001>

<llo_original>
// kernel: resblock_forward.2
$region0: #{resblock_forward.2}
  #allocation0 [shape = 'u32[]', space=smem, size = 0x4, offset = 0x4, fixed_abs, tag = 'smem constant byte address 0x4 - core index']
  #allocation1 [shape = 'u32[72,128]{1,0:T(1,128)}', space=vmem, size = 0x9000, scoped, tag = 'internal scratch']
  #allocation2 [shape = 'bf16[36,288]{1,0:T(8,128)(2,1)}', space=vmem, size = 0x7800, scoped, tag = 'scratch operand']
  %s0 = inlined_call_operand.vmem [shape: bf16[2,4,342], index: 0, kind: input, shape index: {}]
  %s1 = inlined_call_operand.vmem [shape: bf16[8,36], index: 1, kind: input, shape index: {}]
  %s2 = inlined_call_operand.vmem [shape: f32[1,288], index: 2, kind: input, shape index: {}]
  %s3 = inlined_call_operand.vmem [shape: f32[2,8,288], index: 3, kind: output, shape index: {0}]
  %s4 = inlined_call_operand.vmem [shape: f32[2,8,1], index: 4, kind: output, shape index: {1}]
  %s5 = inlined_call_operand.vmem [shape: f32[2,8,1], index: 5, kind: output, shape index: {2}]
  %6 = xla_tuple %s3, %s4, %s5
  %s7 = sld [smem:[#allocation0]]
  $region61: #{resblock_forward.2} parent=0
    _
  %s9 = ssub.s32 1, %s7
  %s10 = scalar_select 0, %s9, %s7
  loop: start=0, step=1, limit=4
  $region2: #{resblock_forward.2} parent=0 // loop_pre_header
    _
  $region3: #{resblock_forward.2} parent=0 // loop_header
    %s12 = sphi 0, %s16
    %p13 = scmp.ge.s32.totalorder %s12, 4
    %s22 = sphi 0, %s24
    %s25 = sphi 0, %s22
    %s26 = sphi 0, %s25
    %s42 = sphi 0, %s26
    %s46 = sphi 0, %s46
    %s48 = sphi 0, %s46
    %s49 = sphi 0, %s48
    %s63 = sphi 0, %s49
    %s67 = sphi 0, %s67
    %s69 = sphi 0, %s67
    %s70 = sphi 0, %s69
    %s84 = sphi 0, %s70
    %s90 = sphi 0, %s92
    %s93 = sphi 0, %s90
    %s94 = sphi 0, %s93
    %s110 = sphi 0, %s94
    %s116 = sphi 0, %s118
    %s119 = sphi 0, %s116
    %s120 = sphi 0, %s119
    %s136 = sphi 0, %s120
    %s142 = sphi 0, %s144
    %s145 = sphi 0, %s142
    %s146 = sphi 0, %s145
    %s162 = sphi 0, %s146
  $region4: #{resblock_forward.2} parent=0 // loop_header_branch
    %15 = sbr.rel (%p13) target = $region8
  $region5: #{resblock_forward.2} parent=0 // loop_body
    %s17 = ssub.s32 %s12, 1
    %s18 = ssub.s32 %s12, 2
    %s19 = sadd.s32 %s12, 1
    %s20 = ssub.s32 %s12, %s19
    %p21 = scmp.eq.s32.totalorder %s20, 0
    %s23 = sadd.s32 %s22, 1
    %s24 = scalar_select %p21, %s22, %s23
    %p27 = pneg %p21
    %p28 = scmp.eq.s32.totalorder %s12, 1
    %p29 = por %p27, %p28
    %p30 = scmp.ne.s32.totalorder %s22, %s25
    %p31 = scmp.eq.s32.totalorder %s12, 0
    %p32 = por %p30, %p31
    %p33 = scmp.ne.s32.totalorder %s22, %s25
    %p34 = scmp.eq.s32.totalorder %s17, 1
    %p35 = por %p33, %p34
    %p36 = scmp.ne.s32.totalorder %s25, %s26
    %p37 = scmp.eq.s32.totalorder %s17, 0
    %p38 = por %p36, %p37
    %p39 = scmp.ne.s32.totalorder %s25, %s26
    %p40 = scmp.eq.s32.totalorder %s18, 1
    %p41 = por %p39, %p40
    %p43 = scmp.ne.s32.totalorder %s26, %s42
    %p44 = scmp.eq.s32.totalorder %s18, 0
    %p45 = por %p43, %p44
    %s47 = sadd.s32 %s46, 1
    %p50 = scmp.eq.s32.totalorder %s12, 1
    %p51 = scmp.ne.s32.totalorder %s46, %s48
    %p52 = scmp.eq.s32.totalorder %s12, 0
    %p53 = por %p51, %p52
    %p54 = scmp.ne.s32.totalorder %s46, %s48
    %p55 = scmp.eq.s32.totalorder %s17, 1
    %p56 = por %p54, %p55
    %p57 = scmp.ne.s32.totalorder %s48, %s49
    %p58 = scmp.eq.s32.totalorder %s17, 0
    %p59 = por %p57, %p58
    %p60 = scmp.ne.s32.totalorder %s48, %s49
    %p61 = scmp.eq.s32.totalorder %s18, 1
    %p62 = por %p60, %p61
    %p64 = scmp.ne.s32.totalorder %s49, %s63
    %p65 = scmp.eq.s32.totalorder %s18, 0
    %p66 = por %p64, %p65
    %s68 = sadd.s32 %s67, 1
    %p71 = scmp.eq.s32.totalorder %s12, 1
    %p72 = scmp.ne.s32.totalorder %s67, %s69
    %p73 = scmp.eq.s32.totalorder %s12, 0
    %p74 = por %p72, %p73
    %p75 = scmp.ne.s32.totalorder %s67, %s69
    %p76 = scmp.eq.s32.totalorder %s17, 1
    %p77 = por %p75, %p76
    %p78 = scmp.ne.s32.totalorder %s69, %s70
    %p79 = scmp.eq.s32.totalorder %s17, 0
    %p80 = por %p78, %p79
    %p81 = scmp.ne.s32.totalorder %s69, %s70
    %p82 = scmp.eq.s32.totalorder %s18, 1
    %p83 = por %p81, %p82
    %p85 = scmp.ne.s32.totalorder %s70, %s84
    %p86 = scmp.eq.s32.totalorder %s18, 0
    %p87 = por %p85, %p86
    %s88 = ssub.s32 %s12, %s19
    %p89 = scmp.eq.s32.totalorder %s88, 0
    %s91 = sadd.s32 %s90, 1
    %s92 = scalar_select %p89, %s90, %s91
    %p95 = pneg %p89
    %p96 = scmp.eq.s32.totalorder %s12, 1
    %p97 = por %p95, %p96
    %p98 = scmp.ne.s32.totalorder %s90, %s93
    %p99 = scmp.eq.s32.totalorder %s12, 0
    %p100 = por %p98, %p99
    %p101 = scmp.ne.s32.totalorder %s90, %s93
    %p102 = scmp.eq.s32.totalorder %s17, 1
    %p103 = por %p101, %p102
    %p104 = scmp.ne.s32.totalorder %s93, %s94
    %p105 = scmp.eq.s32.totalorder %s17, 0
    %p106 = por %p104, %p105
    %p107 = scmp.ne.s32.totalorder %s93, %s94
    %p108 = scmp.eq.s32.totalorder %s18, 1
    %p109 = por %p107, %p108
    %p111 = scmp.ne.s32.totalorder %s94, %s110
    %p112 = scmp.eq.s32.totalorder %s18, 0
    %p113 = por %p111, %p112
    %s114 = ssub.s32 %s12, %s19
    %p115 = scmp.eq.s32.totalorder %s114, 0
    %s117 = sadd.s32 %s116, 1
    %s118 = scalar_select %p115, %s116, %s117
    %p121 = pneg %p115
    %p122 = scmp.eq.s32.totalorder %s12, 1
    %p123 = por %p121, %p122
    %p124 = scmp.ne.s32.totalorder %s116, %s119
    %p125 = scmp.eq.s32.totalorder %s12, 0
    %p126 = por %p124, %p125
    %p127 = scmp.ne.s32.totalorder %s116, %s119
    %p128 = scmp.eq.s32.totalorder %s17, 1
    %p129 = por %p127, %p128
    %p130 = scmp.ne.s32.totalorder %s119, %s120
    %p131 = scmp.eq.s32.totalorder %s17, 0
    %p132 = por %p130, %p131
    %p133 = scmp.ne.s32.totalorder %s119, %s120
    %p134 = scmp.eq.s32.totalorder %s18, 1
    %p135 = por %p133, %p134
    %p137 = scmp.ne.s32.totalorder %s120, %s136
    %p138 = scmp.eq.s32.totalorder %s18, 0
    %p139 = por %p137, %p138
    %s140 = ssub.s32 %s12, %s19
    %p141 = scmp.eq.s32.totalorder %s140, 0
    %s143 = sadd.s32 %s142, 1
    %s144 = scalar_select %p141, %s142, %s143
    %p147 = pneg %p141
    %p148 = scmp.eq.s32.totalorder %s12, 1
    %p149 = por %p147, %p148
    %p150 = scmp.ne.s32.totalorder %s142, %s145
    %p151 = scmp.eq.s32.totalorder %s12, 0
    %p152 = por %p150, %p151
    %p153 = scmp.ne.s32.totalorder %s142, %s145
    %p154 = scmp.eq.s32.totalorder %s17, 1
    %p155 = por %p153, %p154
    %p156 = scmp.ne.s32.totalorder %s145, %s146
    %p157 = scmp.eq.s32.totalorder %s17, 0
    %p158 = por %p156, %p157
    %p159 = scmp.ne.s32.totalorder %s145, %s146
    %p160 = scmp.eq.s32.totalorder %s18, 1
    %p161 = por %p159, %p160
    %p163 = scmp.ne.s32.totalorder %s146, %s162
    %p164 = scmp.eq.s32.totalorder %s18, 0
    %p165 = por %p163, %p164
    %p166 = scmp.le.s32.totalorder 1, %s12
    %p167 = scmp.lt.s32.totalorder %s12, 3
    %p168 = pnand %p166, %p167
    %p169 = pneg %p168
    // Predicated region
    $region9: #{resblock_forward.2} parent=5 // pred_check
      _
    $region10: #{resblock_forward.2} parent=5 // pred_check_branch
      %171 = sbr.rel (%p168) target = $region12
    $region11: #{resblock_forward.2} parent=5 // pred_region
      %s172 = ssub.s32 %s12, 1
      // Predicated region
      $region13: #{resblock_forward.2} parent=11 // pred_check
        %p173 = pneg %p59
      $region14: #{resblock_forward.2} parent=11 // pred_check_branch
        %175 = sbr.rel (%p173) target = $region16
      $region15: #{resblock_forward.2} parent=11 // pred_region
        _
      $region16: #{resblock_forward.2} parent=11 // pred_fallthru
        _
      // Predicated region
      $region17: #{resblock_forward.2} parent=11 // pred_check
        %p176 = pneg %p80
      $region18: #{resblock_forward.2} parent=11 // pred_check_branch
        %178 = sbr.rel (%p176) target = $region20
      $region19: #{resblock_forward.2} parent=11 // pred_region
        _
      $region20: #{resblock_forward.2} parent=11 // pred_fallthru
        _
    $region12: #{resblock_forward.2} parent=5 // pred_fallthru
      _
    %p179 = scmp.lt.s32.totalorder %s12, 2
    // Predicated region
    $region21: #{resblock_forward.2} parent=5 // pred_check
      %p180 = pneg %p179
    $region22: #{resblock_forward.2} parent=5 // pred_check_branch
      %182 = sbr.rel (%p180) target = $region24
    $region23: #{resblock_forward.2} parent=5 // pred_region
      // Predicated region
      $region25: #{resblock_forward.2} parent=23 // pred_check
        %p183 = pneg %p32
      $region26: #{resblock_forward.2} parent=23 // pred_check_branch
        %185 = sbr.rel (%p183) target = $region28
      $region27: #{resblock_forward.2} parent=23 // pred_region
        %p186 = scmp.lt.s32.totalorder %s12, 1
        %s187 = scalar_select %p186, %s12, 1
        %s188 = smul.addr %s187, 3
        %s189 = smul.addr %s188, 2
        %s190 = scalar_lea.vmem %s0, %s189
      $region28: #{resblock_forward.2} parent=23 // pred_fallthru
        _
    $region24: #{resblock_forward.2} parent=5 // pred_fallthru
      _
    %p191 = scmp.le.s32.totalorder 1, %s12
    %p192 = scmp.lt.s32.totalorder %s12, 3
    %p193 = pnand %p191, %p192
    %p194 = pneg %p193
    // Predicated region
    $region29: #{resblock_forward.2} parent=5 // pred_check
      _
    $region30: #{resblock_forward.2} parent=5 // pred_check_branch
      %196 = sbr.rel (%p193) target = $region32
    $region31: #{resblock_forward.2} parent=5 // pred_region
      %s197 = ssub.s32 %s12, 1
      %p198 = scmp.lt.s32.totalorder %s17, 1
      %s199 = scalar_select %p198, %s17, 1
      %s200 = smul.addr %s199, 3
      %s201 = smul.addr %s200, 2
      %s202 = scalar_lea.vmem %s0, %s201
      %p203 = pneg %p38
      %p204 = pneg %p35
      %p205 = pneg %p59
      %p206 = pneg %p56
      %p207 = pneg %p80
      %p208 = pneg %p77
      %p209 = pneg %p106
      %p210 = pneg %p103
      %p211 = scmp.lt.s32.totalorder %s17, 1
      %s212 = scalar_select %p211, %s17, 1
      %s213 = smul.addr %s212, 3
      %s214 = smul.addr %s213, 8
      %s215 = scalar_lea.vmem %s3, %s214
      %p216 = pneg %p132
      %p217 = pneg %p129
      %p218 = scmp.lt.s32.totalorder %s17, 1
      %s219 = scalar_select %p218, %s17, 1
      %s220 = smul.addr %s219, 8
      %s221 = scalar_lea.vmem %s4, %s220
      %p222 = pneg %p158
      %p223 = pneg %p155
      %p224 = scmp.lt.s32.totalorder %s17, 1
      %s225 = scalar_select %p224, %s17, 1
      %s226 = smul.addr %s225, 8
      %s227 = scalar_lea.vmem %s5, %s226
      %p228 = scmp.lt.s32.totalorder %s17, 1
      %s229 = scalar_select %p228, %s17, 1
      %s230 = smul.addr %s229, 3
      %s231 = smul.addr %s230, 2
      %s232 = scalar_lea.vmem %s0, %s231
      %p233 = scmp.lt.s32.totalorder %s17, 1
      %s234 = scalar_select %p233, %s17, 1
      %s235 = smul.addr %s234, 3
      %s236 = smul.addr %s235, 8
      %s237 = scalar_lea.vmem %s3, %s236
      %p238 = scmp.lt.s32.totalorder %s17, 1
      %s239 = scalar_select %p238, %s17, 1
      %s240 = smul.addr %s239, 8
      %s241 = scalar_lea.vmem %s4, %s240
      %p242 = scmp.lt.s32.totalorder %s17, 1
      %s243 = scalar_select %p242, %s17, 1
      %s244 = smul.addr %s243, 8
      %s245 = scalar_lea.vmem %s5, %s244
      %v247 = vld [vmem:[%s232] sm:$0x3f]
      %249 = vst [vmem:[#allocation1] ss:$2 sm:$0xff] %v247
      %v250 = vld.sshfl [vmem:[#allocation1] sm:$0xff pattern:$0x75643120]
      %v251 = vld.sshfl [vmem:[#allocation1 + $0x8] sm:$0xff pattern:$0x75643120]
      %254 = vst [vmem:[#allocation2] sm:$0x33] %v250
      %vm255 = vcmask 254976
      %256 = vst.msk [vmem:[#allocation2 + $0x8] sm:$0x3] %vm255, %v251
      %v257 = vld [vmem:[%s232] sm:$0x3f]
      %s259 = scalar_lea.vmem [#allocation1], 1
      %260 = vst [vmem:[%s259] ss:$2 sm:$0xff] %v257
      %v261 = vld.sshfl [vmem:[#allocation1] sm:$0xff pattern:$0x75643120]
      %v263 = vld.sshfl [vmem:[#allocation1 + $0x8] sm:$0xff pattern:$0x75643120]
      %265 = vrot.lane.b32.xlu0 %v261, 127
      %v266 = vpop.permute.xlu0 %265
      %267 = vrot.lane.b32.xlu0 %v263, 127
      %v268 = vpop.permute.xlu0 %267
      %v269 = vrot.slane %v266, 4
      %v270 = vrot.slane %v268, 4
      %vm271 = vcmask 1043456
      %v272 = vsel %vm271, %v269, %v270
      %vm273 = vcmask 1039360
      %v274 = vsel %vm273, %v266, %v272
      %277 = vst [vmem:[#allocation2] sm:$0xcc] %v274
      %vm278 = vcmask 257026
      %279 = vst.msk [vmem:[#allocation2 + $0x8] sm:$0xc] %vm278, %v268
      %v280 = vld [vmem:[%s232] sm:$0x3f]
      %282 = vst [vmem:[#allocation1] ss:$2 sm:$0xff] %v280
      %v283 = vld.sshfl [vmem:[#allocation1] sm:$0xff pattern:$0x75643120]
      %v285 = vld.sshfl [vmem:[#allocation1 + $0x8] sm:$0xff pattern:$0x75643120]
      %287 = vrot.lane.b32.xlu0 %v283, 126
      %v288 = vpop.permute.xlu0 %287
      %289 = vrot.lane.b32.xlu0 %v285, 126
      %v290 = vpop.permute.xlu0 %289
      %v291 = vrot.slane %v288, 4
      %v292 = vrot.slane %v290, 4
      %v293 = vsel %vm271, %v291, %v292
      %vm294 = vcmask 1031168
      %v295 = vsel %vm294, %v288, %v293
      %298 = vst [vmem:[#allocation2 + $0xc] sm:$0x33] %v295
      %299 = vst.msk [vmem:[#allocation2 + $0x14] sm:$0x3] %vm255, %v290
      %v300 = vld [vmem:[%s232] sm:$0x3f]
      %s302 = scalar_lea.vmem [#allocation1], 1
      %303 = vst [vmem:[%s302] ss:$2 sm:$0xff] %v300
      %v304 = vld.sshfl [vmem:[#allocation1] sm:$0xff pattern:$0x75643120]
      %v306 = vld.sshfl [vmem:[#allocation1 + $0x8] sm:$0xff pattern:$0x75643120]
      %308 = vrot.lane.b32.xlu0 %v304, 110
      %v309 = vpop.permute.xlu0 %308
      %310 = vrot.lane.b32.xlu0 %v306, 110
      %v311 = vpop.permute.xlu0 %310
      %v312 = vrot.slane %v309, 4
      %v313 = vrot.slane %v311, 4
      %v314 = vsel %vm271, %v312, %v313
      %vm315 = vcmask 900096
      %v316 = vsel %vm315, %v309, %v314
      %319 = vst [vmem:[#allocation2 + $0xc] sm:$0xcc] %v316
      %320 = vst.msk [vmem:[#allocation2 + $0x14] sm:$0xc] %vm278, %v311
      %v321 = vld [vmem:[%s232] sm:$0x3f]
      %323 = vst [vmem:[#allocation1] ss:$2 sm:$0xff] %v321
      %v324 = vld.sshfl [vmem:[#allocation1] sm:$0xff pattern:$0x75643120]
      %v326 = vld.sshfl [vmem:[#allocation1 + $0x8] sm:$0xff pattern:$0x75643120]
      %328 = vrot.lane.b32.xlu0 %v324, 109
      %v329 = vpop.permute.xlu0 %328
      %330 = vrot.lane.b32.xlu0 %v326, 109
      %v331 = vpop.permute.xlu0 %330
      %v332 = vrot.slane %v329, 4
      %v333 = vrot.slane %v331, 4
      %v334 = vsel %vm271, %v332, %v333
      %vm335 = vcmask 891904
      %v336 = vsel %vm335, %v329, %v334
      %339 = vst [vmem:[#allocation2 + $0x18] sm:$0x33] %v336
      %340 = vst.msk [vmem:[#allocation2 + $0x20] sm:$0x3] %vm255, %v331
      %v341 = vld [vmem:[%s232] sm:$0x3f]
      %s343 = scalar_lea.vmem [#allocation1], 1
      %344 = vst [vmem:[%s343] ss:$2 sm:$0xff] %v341
      %v345 = vld.sshfl [vmem:[#allocation1] sm:$0xff pattern:$0x75643120]
      %v347 = vld.sshfl [vmem:[#allocation1 + $0x8] sm:$0xff pattern:$0x75643120]
      %349 = vrot.lane.b32.xlu0 %v345, 108
      %v350 = vpop.permute.xlu0 %349
      %351 = vrot.lane.b32.xlu0 %v347, 108
      %v352 = vpop.permute.xlu0 %351
      %v353 = vrot.slane %v350, 4
      %v354 = vrot.slane %v352, 4
      %v355 = vsel %vm271, %v353, %v354
      %vm356 = vcmask 883712
      %v357 = vsel %vm356, %v350, %v355
      %360 = vst [vmem:[#allocation2 + $0x18] sm:$0xcc] %v357
      %361 = vst.msk [vmem:[#allocation2 + $0x20] sm:$0xc] %vm278, %v352
      %v362 = vld [vmem:[%s232] sm:$0x3f]
      %364 = vst [vmem:[#allocation1] ss:$2 sm:$0xff] %v362
      %v365 = vld.sshfl [vmem:[#allocation1] sm:$0xff pattern:$0x75643120]
      %v367 = vld.sshfl [vmem:[#allocation1 + $0x8] sm:$0xff pattern:$0x75643120]
      %369 = vrot.lane.b32.xlu0 %v365, 92
      %v370 = vpop.permute.xlu0 %369
      %371 = vrot.lane.b32.xlu0 %v367, 92
      %v372 = vpop.permute.xlu0 %371
      %v373 = vrot.slane %v370, 4
      %v374 = vrot.slane %v372, 4
      %v375 = vsel %vm271, %v373, %v374
      %vm376 = vcmask 752640
      %v377 = vsel %vm376, %v370, %v375
      %380 = vst [vmem:[#allocation2 + $0x24] sm:$0x33] %v377
      %381 = vst.msk [vmem:[#allocation2 + $0x2c] sm:$0x3] %vm255, %v372
      %v382 = vld [vmem:[%s232] sm:$0x3f]
      %s384 = scalar_lea.vmem [#allocation1], 1
      %385 = vst [vmem:[%s384] ss:$2 sm:$0xff] %v382
      %v386 = vld.sshfl [vmem:[#allocation1] sm:$0xff pattern:$0x75643120]
      %v388 = vld.sshfl [vmem:[#allocation1 + $0x8] sm:$0xff pattern:$0x75643120]
      %390 = vrot.lane.b32.xlu0 %v386, 91
      %v391 = vpop.permute.xlu0 %390
      %392 = vrot.lane.b32.xlu0 %v388, 91
      %v393 = vpop.permute.xlu0 %392
      %v394 = vrot.slane %v391, 4
      %v395 = vrot.slane %v393, 4
      %v396 = vsel %vm271, %v394, %v395
      %vm397 = vcmask 744448
      %v398 = vsel %vm397, %v391, %v396
      %401 = vst [vmem:[#allocation2 + $0x24] sm:$0xcc] %v398
      %402 = vst.msk [vmem:[#allocation2 + $0x2c] sm:$0xc] %vm278, %v393
      %v403 = vld [vmem:[%s232] sm:$0x3f]
      %405 = vst [vmem:[#allocation1] ss:$2 sm:$0xff] %v403
      %v406 = vld.sshfl [vmem:[#allocation1] sm:$0xff pattern:$0x75643120]
      %v408 = vld.sshfl [vmem:[#allocation1 + $0x8] sm:$0xff pattern:$0x75643120]
      %410 = vrot.lane.b32.xlu0 %v406, 90
      %v411 = vpop.permute.xlu0 %410
      %412 = vrot.lane.b32.xlu0 %v408, 90
      %v413 = vpop.permute.xlu0 %412
      %v414 = vrot.slane %v411, 4
      %v415 = vrot.slane %v413, 4
      %v416 = vsel %vm271, %v414, %v415
      %vm417 = vcmask 736256
      %v418 = vsel %vm417, %v411, %v416
      %421 = vst [vmem:[#allocation2 + $0x30] sm:$0x33] %v418
      %422 = vst.msk [vmem:[#allocation2 + $0x38] sm:$0x3] %vm255, %v413
      %v423 = vld [vmem:[%s1] sm:$0xf]
      %v424 = vld [vmem:[#allocation2] sm:$0xff]
      %v425 = vld [vmem:[#allocation2 + $0x8] sm:$0xf]
      %v426 = vld [vmem:[#allocation2 + $0xc] sm:$0xff]
      %v427 = vld [vmem:[#allocation2 + $0x14] sm:$0xf]
      %v428 = vld [vmem:[#allocation2 + $0x18] sm:$0xff]
      %v429 = vld [vmem:[#allocation2 + $0x20] sm:$0xf]
      %v430 = vld [vmem:[#allocation2 + $0x24] sm:$0xff]
      %v431 = vld [vmem:[#allocation2 + $0x2c] sm:$0xf]
      %v432 = vld [vmem:[#allocation2 + $0x30] sm:$0x33]
      %v433 = vld [vmem:[#allocation2 + $0x38] sm:$0x3]
      %v444 = vunpack.c.l.b16 %v424
      %v445 = vunpack.c.h.b16 %v424
      %v446 = vunpack.c.l.b16 %v425
      %v447 = vunpack.c.l.b16 %v426
      %v448 = vunpack.c.h.b16 %v426
      %v449 = vunpack.c.l.b16 %v427
      %v450 = vunpack.c.l.b16 %v428
      %v451 = vunpack.c.h.b16 %v428
      %v452 = vunpack.c.l.b16 %v429
      %v453 = vunpack.c.l.b16 %v430
      %v454 = vunpack.c.h.b16 %v430
      %v455 = vunpack.c.l.b16 %v431
      %v456 = vunpack.c.l.b16 %v432
      %v457 = vunpack.c.h.b16 %v432
      %v458 = vunpack.c.l.b16 %v433
      %v459 = vpack.c.b16 %v447, %v444
      %v460 = vpack.c.b16 %v448, %v445
      %v461 = vpack.c.b16 %v449, %v446
      %v462 = vpack.c.b16 %v453, %v450
      %v463 = vpack.c.b16 %v454, %v451
      %v464 = vpack.c.b16 %v455, %v452
      %v465 = vpack.c.b16 %v456, %v456
      %v466 = vpack.c.b16 %v457, %v457
      %v467 = vpack.c.b16 %v458, %v458
      %vm474 = vcmask 293888
      %v476 = vsel %vm474, %v423, 0
      %vm478 = vcmask 1041408
      %v480 = vsel %vm478, %v465, 0
      %v483 = vsel %vm478, %v466, 0
      %v486 = vsel %vm478, %v467, 0
      %488 = vmatpush.bf16.msra.mxu0 0
      %489 = vmatpush.bf16.msra.mxu0 0
      %490 = vmatpush.bf16.msra.mxu0 0
      %491 = vmatpush.bf16.msra.mxu0 0
      %492 = vmatpush.bf16.msra.mxu0 0
      %493 = vmatpush.bf16.msra.mxu0 %v480
      %494 = vmatpush.bf16.msra.mxu0 %v462
      %495 = vmatpush.bf16.msra.mxu0 %v459
      %496 = vmatmul.bf16.gmra.mxu0 %v476
      %v497 = vpop.f32.mrf.mxu0
      %v498 = vadd.f32 0.0, %v497
      %v499 = vpop.f32.mrf.mxu0
      %500 = vdwg.mxu0
      %501 = vmatpush.bf16.msra.mxu0 0
      %502 = vmatpush.bf16.msra.mxu0 0
      %503 = vmatpush.bf16.msra.mxu0 0
      %504 = vmatpush.bf16.msra.mxu0 0
      %505 = vmatpush.bf16.msra.mxu0 0
      %506 = vmatpush.bf16.msra.mxu0 %v483
      %507 = vmatpush.bf16.msra.mxu0 %v463
      %508 = vmatpush.bf16.msra.mxu0 %v460
      %509 = vmatmul.bf16.gmra.mxu0 %v476
      %v510 = vpop.f32.mrf.mxu0
      %v511 = vadd.f32 0.0, %v510
      %v512 = vpop.f32.mrf.mxu0
      %513 = vdwg.mxu0
      %514 = vmatpush.bf16.msra.mxu0 0
      %515 = vmatpush.bf16.msra.mxu0 0
      %516 = vmatpush.bf16.msra.mxu0 0
      %517 = vmatpush.bf16.msra.mxu0 0
      %518 = vmatpush.bf16.msra.mxu0 0
      %519 = vmatpush.bf16.msra.mxu0 %v486
      %520 = vmatpush.bf16.msra.mxu0 %v464
      %521 = vmatpush.bf16.msra.mxu0 %v461
      %522 = vmatmul.bf16.gmra.mxu0 %v476
      %v523 = vpop.f32.mrf.mxu0
      %v524 = vadd.f32 0.0, %v523
      %v525 = vpop.f32.mrf.mxu0
      %526 = vdwg.mxu0
      %527 = vst [vmem:[%s237] sm:$0xff] %v498
      %528 = vst [vmem:[%s237 + $0x8] sm:$0xff] %v511
      %vm529 = vcmask 261120
      %530 = vst.msk [vmem:[%s237 + $0x10] sm:$0xff] %vm529, %v524
      %v531 = vld [vmem:[%s2] sm:$0x7]
      %v533 = vperm.slane %v531, 0
      %v534 = vperm.slane %v531, 1
      %v535 = vperm.slane %v531, 2
      %v539 = vmul.f32 %v498, %v533
      %v540 = vmul.f32 %v511, %v534
      %v541 = vmul.f32 %v524, %v535
      %v542 = vadd.f32 %v539, %v540
      %v543 = vsel %vm529, %v541, 0.0
      %v544 = vadd.f32 %v542, %v543
      %545 = vadd.xlane.f32.xlu0 %v544
      %v546 = vpop.xlane.xlu0 %545
      %v547 = vmul.f32 %v546, 0.00390625
      %v548 = vsub.f32 %v498, %v547
      %v549 = vsub.f32 %v511, %v547
      %v550 = vsub.f32 %v524, %v547
      %v551 = vmul.f32 %v548, %v533
      %v552 = vmul.f32 %v549, %v534
      %v553 = vmul.f32 %v550, %v535
      %v554 = vmul.f32 %v551, %v551
      %v555 = vmul.f32 %v552, %v552
      %v556 = vmul.f32 %v553, %v553
      %v557 = vadd.f32 %v554, %v555
      %v558 = vsel %vm529, %v556, 0.0
      %v559 = vadd.f32 %v557, %v558
      %560 = vadd.xlane.f32.xlu0 %v559
      %v561 = vpop.xlane.xlu0 %560
      %vm562 = vcmask 7168
      %563 = vst.msk [vmem:[%s241] sm:$0xff] %vm562, %v547
      %564 = vst.msk [vmem:[%s245] sm:$0xff] %vm562, %v561
      %p565 = scmp.lt.s32.totalorder %s17, 1
      %s566 = scalar_select %p565, %s17, 1
      %s567 = smul.addr %s566, 3
      %s568 = smul.addr %s567, 8
      %s569 = scalar_lea.vmem %s3, %s568
      %p570 = scmp.lt.s32.totalorder %s17, 1
      %s571 = scalar_select %p570, %s17, 1
      %s572 = smul.addr %s571, 8
      %s573 = scalar_lea.vmem %s4, %s572
      %p574 = scmp.lt.s32.totalorder %s17, 1
      %s575 = scalar_select %p574, %s17, 1
      %s576 = smul.addr %s575, 8
      %s577 = scalar_lea.vmem %s5, %s576
      // Predicated region
      $region33: #{resblock_forward.2} parent=31 // pred_check
        %p578 = pneg %p103
      $region34: #{resblock_forward.2} parent=31 // pred_check_branch
        %580 = sbr.rel (%p578) target = $region36
      $region35: #{resblock_forward.2} parent=31 // pred_region
        _
      $region36: #{resblock_forward.2} parent=31 // pred_fallthru
        _
      // Predicated region
      $region37: #{resblock_forward.2} parent=31 // pred_check
        %p581 = pneg %p129
      $region38: #{resblock_forward.2} parent=31 // pred_check_branch
        %583 = sbr.rel (%p581) target = $region40
      $region39: #{resblock_forward.2} parent=31 // pred_region
        _
      $region40: #{resblock_forward.2} parent=31 // pred_fallthru
        _
      // Predicated region
      $region41: #{resblock_forward.2} parent=31 // pred_check
        %p584 = pneg %p155
      $region42: #{resblock_forward.2} parent=31 // pred_check_branch
        %586 = sbr.rel (%p584) target = $region44
      $region43: #{resblock_forward.2} parent=31 // pred_region
        _
      $region44: #{resblock_forward.2} parent=31 // pred_fallthru
        _
    $region32: #{resblock_forward.2} parent=5 // pred_fallthru
      _
    %p587 = scmp.le.s32.totalorder 2, %s12
    // Predicated region
    $region45: #{resblock_forward.2} parent=5 // pred_check
      %p588 = pneg %p587
    $region46: #{resblock_forward.2} parent=5 // pred_check_branch
      %590 = sbr.rel (%p588) target = $region48
    $region47: #{resblock_forward.2} parent=5 // pred_region
      %s591 = ssub.s32 %s12, 2
      // Predicated region
      $region49: #{resblock_forward.2} parent=47 // pred_check
        %p592 = pneg %p109
      $region50: #{resblock_forward.2} parent=47 // pred_check_branch
        %594 = sbr.rel (%p592) target = $region52
      $region51: #{resblock_forward.2} parent=47 // pred_region
        %p595 = scmp.lt.s32.totalorder %s18, 1
        %s596 = scalar_select %p595, %s18, 1
        %s597 = smul.addr %s596, 3
        %s598 = smul.addr %s597, 8
        %s599 = scalar_lea.vmem %s3, %s598
      $region52: #{resblock_forward.2} parent=47 // pred_fallthru
        _
      // Predicated region
      $region53: #{resblock_forward.2} parent=47 // pred_check
        %p600 = pneg %p135
      $region54: #{resblock_forward.2} parent=47 // pred_check_branch
        %602 = sbr.rel (%p600) target = $region56
      $region55: #{resblock_forward.2} parent=47 // pred_region
        %p603 = scmp.lt.s32.totalorder %s18, 1
        %s604 = scalar_select %p603, %s18, 1
        %s605 = smul.addr %s604, 8
        %s606 = scalar_lea.vmem %s4, %s605
      $region56: #{resblock_forward.2} parent=47 // pred_fallthru
        _
      // Predicated region
      $region57: #{resblock_forward.2} parent=47 // pred_check
        %p607 = pneg %p161
      $region58: #{resblock_forward.2} parent=47 // pred_check_branch
        %609 = sbr.rel (%p607) target = $region60
      $region59: #{resblock_forward.2} parent=47 // pred_region
        %p610 = scmp.lt.s32.totalorder %s18, 1
        %s611 = scalar_select %p610, %s18, 1
        %s612 = smul.addr %s611, 8
        %s613 = scalar_lea.vmem %s5, %s612
      $region60: #{resblock_forward.2} parent=47 // pred_fallthru
        _
    $region48: #{resblock_forward.2} parent=5 // pred_fallthru
      _
  $region6: #{resblock_forward.2} parent=0 // loop_footer
    %s16 = sadd.s32 1, %s12
  $region7: #{resblock_forward.2} parent=0 // loop_footer_branch
    %11 = sbr.rel target = $region3
  $region8: #{resblock_forward.2} parent=0 // loop_exit
    _

// kernel: resblock_forward.3
$region0: #{resblock_forward.3}
  #allocation0 [shape = 'u32[]', space=smem, size = 0x4, offset = 0x4, fixed_abs, tag = 'smem constant byte address 0x4 - core index']
  #allocation1 [shape = 'u32[72,128]{1,0:T(1,128)}', space=vmem, size = 0x9000, scoped, tag = 'internal scratch']
  %s0 = inlined_call_operand.vmem [shape: f32[2,8,4,64], index: 0, kind: input, shape index: {}]
  %s1 = inlined_call_operand.vmem [shape: f32[8,1], index: 1, kind: input, shape index: {}]
  %s2 = inlined_call_operand.vmem [shape: f32[8,1], index: 2, kind: input, shape index: {}]
  %s3 = inlined_call_operand.vmem [shape: f32[2,8,64], index: 3, kind: output, shape index: {}]
  %s4 = sld [smem:[#allocation0]]
  $region45: #{resblock_forward.3} parent=0
    _
  %s6 = ssub.s32 1, %s4
  %s7 = scalar_select 0, %s6, %s4
  loop: start=0, step=1, limit=4
  $region2: #{resblock_forward.3} parent=0 // loop_pre_header
    _
  $region3: #{resblock_forward.3} parent=0 // loop_header
    %s9 = sphi 0, %s13
    %p10 = scmp.ge.s32.totalorder %s9, 4
    %s19 = sphi 0, %s21
    %s22 = sphi 0, %s19
    %s23 = sphi 0, %s22
    %s39 = sphi 0, %s23
    %s43 = sphi 0, %s43
    %s45 = sphi 0, %s43
    %s46 = sphi 0, %s45
    %s60 = sphi 0, %s46
    %s64 = sphi 0, %s64
    %s66 = sphi 0, %s64
    %s67 = sphi 0, %s66
    %s81 = sphi 0, %s67
    %s87 = sphi 0, %s89
    %s90 = sphi 0, %s87
    %s91 = sphi 0, %s90
    %s107 = sphi 0, %s91
  $region4: #{resblock_forward.3} parent=0 // loop_header_branch
    %12 = sbr.rel (%p10) target = $region8
  $region5: #{resblock_forward.3} parent=0 // loop_body
    %s14 = ssub.s32 %s9, 1
    %s15 = ssub.s32 %s9, 2
    %s16 = sadd.s32 %s9, 1
    %s17 = ssub.s32 %s9, %s16
    %p18 = scmp.eq.s32.totalorder %s17, 0
    %s20 = sadd.s32 %s19, 1
    %s21 = scalar_select %p18, %s19, %s20
    %p24 = pneg %p18
    %p25 = scmp.eq.s32.totalorder %s9, 1
    %p26 = por %p24, %p25
    %p27 = scmp.ne.s32.totalorder %s19, %s22
    %p28 = scmp.eq.s32.totalorder %s9, 0
    %p29 = por %p27, %p28
    %p30 = scmp.ne.s32.totalorder %s19, %s22
    %p31 = scmp.eq.s32.totalorder %s14, 1
    %p32 = por %p30, %p31
    %p33 = scmp.ne.s32.totalorder %s22, %s23
    %p34 = scmp.eq.s32.totalorder %s14, 0
    %p35 = por %p33, %p34
    %p36 = scmp.ne.s32.totalorder %s22, %s23
    %p37 = scmp.eq.s32.totalorder %s15, 1
    %p38 = por %p36, %p37
    %p40 = scmp.ne.s32.totalorder %s23, %s39
    %p41 = scmp.eq.s32.totalorder %s15, 0
    %p42 = por %p40, %p41
    %s44 = sadd.s32 %s43, 1
    %p47 = scmp.eq.s32.totalorder %s9, 1
    %p48 = scmp.ne.s32.totalorder %s43, %s45
    %p49 = scmp.eq.s32.totalorder %s9, 0
    %p50 = por %p48, %p49
    %p51 = scmp.ne.s32.totalorder %s43, %s45
    %p52 = scmp.eq.s32.totalorder %s14, 1
    %p53 = por %p51, %p52
    %p54 = scmp.ne.s32.totalorder %s45, %s46
    %p55 = scmp.eq.s32.totalorder %s14, 0
    %p56 = por %p54, %p55
    %p57 = scmp.ne.s32.totalorder %s45, %s46
    %p58 = scmp.eq.s32.totalorder %s15, 1
    %p59 = por %p57, %p58
    %p61 = scmp.ne.s32.totalorder %s46, %s60
    %p62 = scmp.eq.s32.totalorder %s15, 0
    %p63 = por %p61, %p62
    %s65 = sadd.s32 %s64, 1
    %p68 = scmp.eq.s32.totalorder %s9, 1
    %p69 = scmp.ne.s32.totalorder %s64, %s66
    %p70 = scmp.eq.s32.totalorder %s9, 0
    %p71 = por %p69, %p70
    %p72 = scmp.ne.s32.totalorder %s64, %s66
    %p73 = scmp.eq.s32.totalorder %s14, 1
    %p74 = por %p72, %p73
    %p75 = scmp.ne.s32.totalorder %s66, %s67
    %p76 = scmp.eq.s32.totalorder %s14, 0
    %p77 = por %p75, %p76
    %p78 = scmp.ne.s32.totalorder %s66, %s67
    %p79 = scmp.eq.s32.totalorder %s15, 1
    %p80 = por %p78, %p79
    %p82 = scmp.ne.s32.totalorder %s67, %s81
    %p83 = scmp.eq.s32.totalorder %s15, 0
    %p84 = por %p82, %p83
    %s85 = ssub.s32 %s9, %s16
    %p86 = scmp.eq.s32.totalorder %s85, 0
    %s88 = sadd.s32 %s87, 1
    %s89 = scalar_select %p86, %s87, %s88
    %p92 = pneg %p86
    %p93 = scmp.eq.s32.totalorder %s9, 1
    %p94 = por %p92, %p93
    %p95 = scmp.ne.s32.totalorder %s87, %s90
    %p96 = scmp.eq.s32.totalorder %s9, 0
    %p97 = por %p95, %p96
    %p98 = scmp.ne.s32.totalorder %s87, %s90
    %p99 = scmp.eq.s32.totalorder %s14, 1
    %p100 = por %p98, %p99
    %p101 = scmp.ne.s32.totalorder %s90, %s91
    %p102 = scmp.eq.s32.totalorder %s14, 0
    %p103 = por %p101, %p102
    %p104 = scmp.ne.s32.totalorder %s90, %s91
    %p105 = scmp.eq.s32.totalorder %s15, 1
    %p106 = por %p104, %p105
    %p108 = scmp.ne.s32.totalorder %s91, %s107
    %p109 = scmp.eq.s32.totalorder %s15, 0
    %p110 = por %p108, %p109
    %p111 = scmp.le.s32.totalorder 1, %s9
    %p112 = scmp.lt.s32.totalorder %s9, 3
    %p113 = pnand %p111, %p112
    %p114 = pneg %p113
    // Predicated region
    $region9: #{resblock_forward.3} parent=5 // pred_check
      _
    $region10: #{resblock_forward.3} parent=5 // pred_check_branch
      %116 = sbr.rel (%p113) target = $region12
    $region11: #{resblock_forward.3} parent=5 // pred_region
      %s117 = ssub.s32 %s9, 1
      // Predicated region
      $region13: #{resblock_forward.3} parent=11 // pred_check
        %p118 = pneg %p56
      $region14: #{resblock_forward.3} parent=11 // pred_check_branch
        %120 = sbr.rel (%p118) target = $region16
      $region15: #{resblock_forward.3} parent=11 // pred_region
        _
      $region16: #{resblock_forward.3} parent=11 // pred_fallthru
        _
      // Predicated region
      $region17: #{resblock_forward.3} parent=11 // pred_check
        %p121 = pneg %p77
      $region18: #{resblock_forward.3} parent=11 // pred_check_branch
        %123 = sbr.rel (%p121) target = $region20
      $region19: #{resblock_forward.3} parent=11 // pred_region
        _
      $region20: #{resblock_forward.3} parent=11 // pred_fallthru
        _
    $region12: #{resblock_forward.3} parent=5 // pred_fallthru
      _
    %p124 = scmp.lt.s32.totalorder %s9, 2
    // Predicated region
    $region21: #{resblock_forward.3} parent=5 // pred_check
      %p125 = pneg %p124
    $region22: #{resblock_forward.3} parent=5 // pred_check_branch
      %127 = sbr.rel (%p125) target = $region24
    $region23: #{resblock_forward.3} parent=5 // pred_region
      // Predicated region
      $region25: #{resblock_forward.3} parent=23 // pred_check
        %p128 = pneg %p29
      $region26: #{resblock_forward.3} parent=23 // pred_check_branch
        %130 = sbr.rel (%p128) target = $region28
      $region27: #{resblock_forward.3} parent=23 // pred_region
        %p131 = scmp.lt.s32.totalorder %s9, 1
        %s132 = scalar_select %p131, %s9, 1
        %s133 = smul.addr %s132, 8
        %s134 = smul.addr %s133, 4
        %s135 = scalar_lea.vmem %s0, %s134
      $region28: #{resblock_forward.3} parent=23 // pred_fallthru
        _
    $region24: #{resblock_forward.3} parent=5 // pred_fallthru
      _
    %p136 = scmp.le.s32.totalorder 1, %s9
    %p137 = scmp.lt.s32.totalorder %s9, 3
    %p138 = pnand %p136, %p137
    %p139 = pneg %p138
    // Predicated region
    $region29: #{resblock_forward.3} parent=5 // pred_check
      _
    $region30: #{resblock_forward.3} parent=5 // pred_check_branch
      %141 = sbr.rel (%p138) target = $region32
    $region31: #{resblock_forward.3} parent=5 // pred_region
      %s142 = ssub.s32 %s9, 1
      %p143 = scmp.lt.s32.totalorder %s14, 1
      %s144 = scalar_select %p143, %s14, 1
      %s145 = smul.addr %s144, 8
      %s146 = smul.addr %s145, 4
      %s147 = scalar_lea.vmem %s0, %s146
      %p148 = pneg %p35
      %p149 = pneg %p32
      %p150 = pneg %p56
      %p151 = pneg %p53
      %p152 = pneg %p77
      %p153 = pneg %p74
      %p154 = pneg %p103
      %p155 = pneg %p100
      %p156 = scmp.lt.s32.totalorder %s14, 1
      %s157 = scalar_select %p156, %s14, 1
      %s158 = smul.addr %s157, 8
      %s159 = scalar_lea.vmem %s3, %s158
      %p160 = scmp.lt.s32.totalorder %s14, 1
      %s161 = scalar_select %p160, %s14, 1
      %s162 = smul.addr %s161, 8
      %s163 = smul.addr %s162, 4
      %s164 = scalar_lea.vmem %s0, %s163
      %p165 = scmp.lt.s32.totalorder %s14, 1
      %s166 = scalar_select %p165, %s14, 1
      %s167 = smul.addr %s166, 8
      %s168 = scalar_lea.vmem %s3, %s167
      %v169 = vld [vmem:[%s1] sm:$0xff]
      %v170 = vld [vmem:[%s2] sm:$0xff]
      %v171 = vld [vmem:[%s164] sm:$0x1]
      %v172 = vld [vmem:[%s164 + $0x4] sm:$0x1]
      %v173 = vld [vmem:[%s164 + $0x8] sm:$0x1]
      %v174 = vld [vmem:[%s164 + $0xc] sm:$0x1]
      %v175 = vld [vmem:[%s164 + $0x10] sm:$0x1]
      %v176 = vld [vmem:[%s164 + $0x14] sm:$0x1]
      %v177 = vld [vmem:[%s164 + $0x18] sm:$0x1]
      %v178 = vld [vmem:[%s164 + $0x1c] sm:$0x1]
      %180 = vset.pattern.permute.xlu0 0
      %181 = vperm.xlu0 %180, %v169
      %v182 = vpop.permute.xlu0 %181
      %v183 = vrot.slane %v182, 1
      %v184 = vrot.slane %v182, 2
      %v185 = vrot.slane %v182, 3
      %v186 = vrot.slane %v182, 4
      %v187 = vrot.slane %v182, 5
      %v188 = vrot.slane %v182, 6
      %v189 = vrot.slane %v182, 7
      %v198 = vmul.f32 %v171, %v182
      %v199 = vmul.f32 %v172, %v183
      %v200 = vmul.f32 %v173, %v184
      %v201 = vmul.f32 %v174, %v185
      %v202 = vmul.f32 %v175, %v186
      %v203 = vmul.f32 %v176, %v187
      %v204 = vmul.f32 %v177, %v188
      %v205 = vmul.f32 %v178, %v189
      %207 = vset.pattern.permute.xlu0 0
      %208 = vperm.xlu0 %207, %v170
      %v209 = vpop.permute.xlu0 %208
      %v210 = vrot.slane %v209, 1
      %v211 = vrot.slane %v209, 2
      %v212 = vrot.slane %v209, 3
      %v213 = vrot.slane %v209, 4
      %v214 = vrot.slane %v209, 5
      %v215 = vrot.slane %v209, 6
      %v216 = vrot.slane %v209, 7
      %v225 = vadd.f32 %v198, %v209
      %v226 = vadd.f32 %v199, %v210
      %v227 = vadd.f32 %v200, %v211
      %v228 = vadd.f32 %v201, %v212
      %v229 = vadd.f32 %v202, %v213
      %v230 = vadd.f32 %v203, %v214
      %v231 = vadd.f32 %v204, %v215
      %v232 = vadd.f32 %v205, %v216
      %v233 = vmax.f32 %v225, 0.0
      %v234 = vmax.f32 %v226, 0.0
      %v235 = vmax.f32 %v227, 0.0
      %v236 = vmax.f32 %v228, 0.0
      %v237 = vmax.f32 %v229, 0.0
      %v238 = vmax.f32 %v230, 0.0
      %v239 = vmax.f32 %v231, 0.0
      %v240 = vmax.f32 %v232, 0.0
      %v241 = vld [vmem:[%s164 + $0x1] sm:$0x1]
      %v242 = vld [vmem:[%s164 + $0x5] sm:$0x1]
      %v243 = vld [vmem:[%s164 + $0x9] sm:$0x1]
      %v244 = vld [vmem:[%s164 + $0xd] sm:$0x1]
      %v245 = vld [vmem:[%s164 + $0x11] sm:$0x1]
      %v246 = vld [vmem:[%s164 + $0x15] sm:$0x1]
      %v247 = vld [vmem:[%s164 + $0x19] sm:$0x1]
      %v248 = vld [vmem:[%s164 + $0x1d] sm:$0x1]
      %v249 = vmul.f32 %v241, %v182
      %v250 = vmul.f32 %v242, %v183
      %v251 = vmul.f32 %v243, %v184
      %v252 = vmul.f32 %v244, %v185
      %v253 = vmul.f32 %v245, %v186
      %v254 = vmul.f32 %v246, %v187
      %v255 = vmul.f32 %v247, %v188
      %v256 = vmul.f32 %v248, %v189
      %v257 = vadd.f32 %v249, %v209
      %v258 = vadd.f32 %v250, %v210
      %v259 = vadd.f32 %v251, %v211
      %v260 = vadd.f32 %v252, %v212
      %v261 = vadd.f32 %v253, %v213
      %v262 = vadd.f32 %v254, %v214
      %v263 = vadd.f32 %v255, %v215
      %v264 = vadd.f32 %v256, %v216
      %v265 = vmax.f32 %v257, 0.0
      %v266 = vmax.f32 %v258, 0.0
      %v267 = vmax.f32 %v259, 0.0
      %v268 = vmax.f32 %v260, 0.0
      %v269 = vmax.f32 %v261, 0.0
      %v270 = vmax.f32 %v262, 0.0
      %v271 = vmax.f32 %v263, 0.0
      %v272 = vmax.f32 %v264, 0.0
      %v273 = vadd.f32 %v233, %v265
      %v274 = vadd.f32 %v234, %v266
      %v275 = vadd.f32 %v235, %v267
      %v276 = vadd.f32 %v236, %v268
      %v277 = vadd.f32 %v237, %v269
      %v278 = vadd.f32 %v238, %v270
      %v279 = vadd.f32 %v239, %v271
      %v280 = vadd.f32 %v240, %v272
      %v281 = vld [vmem:[%s164 + $0x2] sm:$0x1]
      %v282 = vld [vmem:[%s164 + $0x6] sm:$0x1]
      %v283 = vld [vmem:[%s164 + $0xa] sm:$0x1]
      %v284 = vld [vmem:[%s164 + $0xe] sm:$0x1]
      %v285 = vld [vmem:[%s164 + $0x12] sm:$0x1]
      %v286 = vld [vmem:[%s164 + $0x16] sm:$0x1]
      %v287 = vld [vmem:[%s164 + $0x1a] sm:$0x1]
      %v288 = vld [vmem:[%s164 + $0x1e] sm:$0x1]
      %v289 = vmul.f32 %v281, %v182
      %v290 = vmul.f32 %v282, %v183
      %v291 = vmul.f32 %v283, %v184
      %v292 = vmul.f32 %v284, %v185
      %v293 = vmul.f32 %v285, %v186
      %v294 = vmul.f32 %v286, %v187
      %v295 = vmul.f32 %v287, %v188
      %v296 = vmul.f32 %v288, %v189
      %v297 = vadd.f32 %v289, %v209
      %v298 = vadd.f32 %v290, %v210
      %v299 = vadd.f32 %v291, %v211
      %v300 = vadd.f32 %v292, %v212
      %v301 = vadd.f32 %v293, %v213
      %v302 = vadd.f32 %v294, %v214
      %v303 = vadd.f32 %v295, %v215
      %v304 = vadd.f32 %v296, %v216
      %v305 = vmax.f32 %v297, 0.0
      %v306 = vmax.f32 %v298, 0.0
      %v307 = vmax.f32 %v299, 0.0
      %v308 = vmax.f32 %v300, 0.0
      %v309 = vmax.f32 %v301, 0.0
      %v310 = vmax.f32 %v302, 0.0
      %v311 = vmax.f32 %v303, 0.0
      %v312 = vmax.f32 %v304, 0.0
      %v313 = vadd.f32 %v273, %v305
      %v314 = vadd.f32 %v274, %v306
      %v315 = vadd.f32 %v275, %v307
      %v316 = vadd.f32 %v276, %v308
      %v317 = vadd.f32 %v277, %v309
      %v318 = vadd.f32 %v278, %v310
      %v319 = vadd.f32 %v279, %v311
      %v320 = vadd.f32 %v280, %v312
      %v321 = vld [vmem:[%s164 + $0x3] sm:$0x1]
      %v322 = vld [vmem:[%s164 + $0x7] sm:$0x1]
      %v323 = vld [vmem:[%s164 + $0xb] sm:$0x1]
      %v324 = vld [vmem:[%s164 + $0xf] sm:$0x1]
      %v325 = vld [vmem:[%s164 + $0x13] sm:$0x1]
      %v326 = vld [vmem:[%s164 + $0x17] sm:$0x1]
      %v327 = vld [vmem:[%s164 + $0x1b] sm:$0x1]
      %v328 = vld [vmem:[%s164 + $0x1f] sm:$0x1]
      %v329 = vmul.f32 %v321, %v182
      %v330 = vmul.f32 %v322, %v183
      %v331 = vmul.f32 %v323, %v184
      %v332 = vmul.f32 %v324, %v185
      %v333 = vmul.f32 %v325, %v186
      %v334 = vmul.f32 %v326, %v187
      %v335 = vmul.f32 %v327, %v188
      %v336 = vmul.f32 %v328, %v189
      %v337 = vadd.f32 %v329, %v209
      %v338 = vadd.f32 %v330, %v210
      %v339 = vadd.f32 %v331, %v211
      %v340 = vadd.f32 %v332, %v212
      %v341 = vadd.f32 %v333, %v213
      %v342 = vadd.f32 %v334, %v214
      %v343 = vadd.f32 %v335, %v215
      %v344 = vadd.f32 %v336, %v216
      %v345 = vmax.f32 %v337, 0.0
      %v346 = vmax.f32 %v338, 0.0
      %v347 = vmax.f32 %v339, 0.0
      %v348 = vmax.f32 %v340, 0.0
      %v349 = vmax.f32 %v341, 0.0
      %v350 = vmax.f32 %v342, 0.0
      %v351 = vmax.f32 %v343, 0.0
      %v352 = vmax.f32 %v344, 0.0
      %v353 = vadd.f32 %v313, %v345
      %v354 = vadd.f32 %v314, %v346
      %v355 = vadd.f32 %v315, %v347
      %v356 = vadd.f32 %v316, %v348
      %v357 = vadd.f32 %v317, %v349
      %v358 = vadd.f32 %v318, %v350
      %v359 = vadd.f32 %v319, %v351
      %v360 = vadd.f32 %v320, %v352
      %v361 = vmul.f32 %v353, 0.25
      %v362 = vmul.f32 %v354, 0.25
      %v363 = vmul.f32 %v355, 0.25
      %v364 = vmul.f32 %v356, 0.25
      %v365 = vmul.f32 %v357, 0.25
      %v366 = vmul.f32 %v358, 0.25
      %v367 = vmul.f32 %v359, 0.25
      %v368 = vmul.f32 %v360, 0.25
      %v377 = vrot.slane %v362, 7
      %vm378 = vcmask 1041409
      %v379 = vsel %vm378, %v377, %v361
      %v380 = vrot.slane %v363, 6
      %vm381 = vcmask 1042434
      %v382 = vsel %vm381, %v380, %v379
      %v383 = vrot.slane %v364, 5
      %vm384 = vcmask 1043459
      %v385 = vsel %vm384, %v383, %v382
      %v386 = vrot.slane %v365, 4
      %vm387 = vcmask 1044484
      %v388 = vsel %vm387, %v386, %v385
      %v389 = vrot.slane %v366, 3
      %vm390 = vcmask 1045509
      %v391 = vsel %vm390, %v389, %v388
      %v392 = vrot.slane %v367, 2
      %vm393 = vcmask 1046534
      %v394 = vsel %vm393, %v392, %v391
      %v395 = vrot.slane %v368, 1
      %vm396 = vcmask 1047559
      %v397 = vsel %vm396, %v395, %v394
      %vm399 = vcmask 523264
      %400 = vst.msk [vmem:[%s168] sm:$0xff] %vm399, %v397
      %p401 = scmp.lt.s32.totalorder %s14, 1
      %s402 = scalar_select %p401, %s14, 1
      %s403 = smul.addr %s402, 8
      %s404 = scalar_lea.vmem %s3, %s403
      // Predicated region
      $region33: #{resblock_forward.3} parent=31 // pred_check
        %p405 = pneg %p100
      $region34: #{resblock_forward.3} parent=31 // pred_check_branch
        %407 = sbr.rel (%p405) target = $region36
      $region35: #{resblock_forward.3} parent=31 // pred_region
        _
      $region36: #{resblock_forward.3} parent=31 // pred_fallthru
        _
    $region32: #{resblock_forward.3} parent=5 // pred_fallthru
      _
    %p408 = scmp.le.s32.totalorder 2, %s9
    // Predicated region
    $region37: #{resblock_forward.3} parent=5 // pred_check
      %p409 = pneg %p408
    $region38: #{resblock_forward.3} parent=5 // pred_check_branch
      %411 = sbr.rel (%p409) target = $region40
    $region39: #{resblock_forward.3} parent=5 // pred_region
      %s412 = ssub.s32 %s9, 2
      // Predicated region
      $region41: #{resblock_forward.3} parent=39 // pred_check
        %p413 = pneg %p106
      $region42: #{resblock_forward.3} parent=39 // pred_check_branch
        %415 = sbr.rel (%p413) target = $region44
      $region43: #{resblock_forward.3} parent=39 // pred_region
        %p416 = scmp.lt.s32.totalorder %s15, 1
        %s417 = scalar_select %p416, %s15, 1
        %s418 = smul.addr %s417, 8
        %s419 = scalar_lea.vmem %s3, %s418
      $region44: #{resblock_forward.3} parent=39 // pred_fallthru
        _
    $region40: #{resblock_forward.3} parent=5 // pred_fallthru
      _
  $region6: #{resblock_forward.3} parent=0 // loop_footer
    %s13 = sadd.s32 1, %s9
  $region7: #{resblock_forward.3} parent=0 // loop_footer_branch
    %8 = sbr.rel target = $region3
  $region8: #{resblock_forward.3} parent=0 // loop_exit
    _

</llo_original>
